<compile_context>
chip_gen: v5e
topology: v5e:2x2
jax: 0.10.0
libtpu: 0.0.40
codegen_flags: <defaults>
</compile_context>

<pallas_src>
import functools
import math

import jax
import jax.numpy as jnp
from jax.experimental import pallas as pl
from jax.experimental.pallas import tpu as pltpu


def _round_up(n, m):
    return ((n + m - 1) // m) * m


def _compiler_params():
    kw = dict(dimension_semantics=("parallel",))
    try:
        cap = pltpu.get_tpu_info().vmem_capacity_bytes
        kw["vmem_limit_bytes"] = int(cap * 0.85)
    except Exception:
        pass  # fall back to the default scoped VMEM limit
    return pltpu.CompilerParams(**kw)


# ----------------------------- conv 3x3 kernel ------------------------------

def _conv3x3_kernel(*refs, act, has_skip, has_se, cin, cin_p, width, pad):
    i = 0
    x_ref = refs[i]; i += 1          # (cin,  HW)   activation dtype
    w_ref = refs[i]; i += 1          # (cout, 9*cin_p)
    b_ref = refs[i]; i += 1          # (cout, 1)    f32
    s_ref = None
    if has_skip:
        s_ref = refs[i]; i += 1      # (cout, HW)
    if has_se:
        xin_ref = refs[i]            # (cout, HW)  res-block input
        df_ref = refs[i + 1]         # (2, 1)      down_factor
        w1_ref = refs[i + 2]         # (chid, cout+2)
        b1_ref = refs[i + 3]         # (chid, 1)
        w2_ref = refs[i + 4]         # (cout, chid)
        b2_ref = refs[i + 5]         # (cout, 1)
        i += 6
    o_ref = refs[i]; i += 1          # (cout, HW)
    xscr_ref = refs[i]; i += 1       # (cin, pad + HW + pad)  row-padded copy
    slab_ref = refs[i]; i += 1       # (9*cin_p, HW)          im2col slab

    hw = x_ref.shape[-1]
    zdt = xscr_ref.dtype

    # Row-padded, VMEM-resident copy of the image: [zeros(pad) | img | zeros(pad)].
    # Replaces the old per-layer XLA jnp.pad HBM round trip.  The interior copy
    # starts at a 128-aligned lane offset so it is an unmasked full-width copy.
    xscr_ref[:, 0:pad] = jnp.zeros((cin, pad), zdt)
    xscr_ref[:, pad + hw:pad + hw + pad] = jnp.zeros((cin, pad), zdt)
    xscr_ref[:, pad:pad + hw] = x_ref[...]

    # Column-validity masks for the kw = -1 / +1 taps (lane position % W).
    col = jax.lax.broadcasted_iota(jnp.int32, (1, hw), 1) % width

    # im2col in the fused-lane layout: every tap is a full lane-width store at
    # a sublane offset (no masked 32-lane writes).  Out-of-image rows read the
    # physical zero padding; out-of-image columns are masked.
    for tap in range(9):
        dh = tap // 3 - 1
        dw = tap % 3 - 1
        start = pad + dh * width + dw
        v = xscr_ref[:, start:start + hw]
        if dw == -1:
            v = jnp.where(col != 0, v, 0)
        elif dw == 1:
            v = jnp.where(col != width - 1, v, 0)
        if cin_p != cin:
            v = jnp.concatenate(
                [v, jnp.zeros((cin_p - cin, hw), zdt)], axis=0)
        slab_ref[tap * cin_p:(tap + 1) * cin_p, :] = v

    # Single fused MXU matmul: (Cout, 9*Cin) @ (9*Cin, H*W), f32 accumulation.
    acc = jnp.dot(w_ref[...], slab_ref[...], preferred_element_type=jnp.float32)
    acc = acc + b_ref[...]
    if act == "relu":
        acc = jnp.maximum(acc, 0.0)
    elif act == "tanh":
        acc = jnp.tanh(acc)
    if has_skip:
        acc = acc + s_ref[...].astype(jnp.float32)

    if has_se:
        # Fused SE: global average pool (lane reduction), tiny MLP, sigmoid,
        # then the residual epilogue x + res*se -- all without leaving VMEM.
        pooled = jnp.sum(acc, axis=1, keepdims=True) * (1.0 / hw)    # (cout, 1)
        sin = jnp.concatenate([pooled, df_ref[...]], axis=0)         # (cout+2, 1)
        h1 = jnp.dot(w1_ref[...], sin,
                     preferred_element_type=jnp.float32) + b1_ref[...]
        h1 = jnp.maximum(h1, 0.0)
        se = jax.nn.sigmoid(
            jnp.dot(w2_ref[...], h1,
                    preferred_element_type=jnp.float32) + b2_ref[...])  # (cout, 1)
        acc = xin_ref[...].astype(jnp.float32) + acc * se

    o_ref[...] = acc.astype(o_ref.dtype)


def conv3x3(x, w, b, height, width, act=None, skip=None, se=None, out_dtype=None):
    """3x3 'same' conv in NC(HW) layout.

    x:    (N, Cin, H*W)   -- channels on sublanes, fused spatial on lanes
    w:    (9, Cin, Cout)  -- tap index t = kh*3 + kw
    b:    (Cout,)
    skip: optional (N, Cout, H*W) added to the conv output.
    se:   optional tuple (x_in, df, se_w1, se_b1, se_w2, se_b2) -> output is
          x_in + conv(x) * sigmoid(MLP([avgpool(conv(x)), df])).
    """
    assert not (skip is not None and se is not None)
    n, cin, hw = x.shape
    assert hw == height * width
    cout = w.shape[-1]
    cdt = x.dtype
    out_dtype = out_dtype or cdt

    cin_p = _round_up(cin, 8)                    # sublane-aligned tap rows
    if cin_p != cin:
        w = jnp.pad(w, ((0, 0), (0, cin_p - cin), (0, 0)))
    wmat = w.reshape(9 * cin_p, cout).T.astype(cdt)      # (Cout, 9*Cin_p)
    bvec = b.reshape(cout, 1).astype(jnp.float32)
    pad = _round_up(width + 1, 128)              # aligned row padding region

    in_specs = [
        pl.BlockSpec((None, cin, hw), lambda i: (i, 0, 0)),
        pl.BlockSpec((cout, 9 * cin_p), lambda i: (0, 0)),
        pl.BlockSpec((cout, 1), lambda i: (0, 0)),
    ]
    args = [x, wmat, bvec]
    if skip is not None:
        in_specs.append(pl.BlockSpec((None, cout, hw), lambda i: (i, 0, 0)))
        args.append(skip)
    if se is not None:
        x_in, df, sw1, sb1, sw2, sb2 = se
        chid = sw1.shape[-1]
        in_specs += [
            pl.BlockSpec((None, cout, hw), lambda i: (i, 0, 0)),   # x_in
            pl.BlockSpec((None, 2, 1), lambda i: (i, 0, 0)),       # down_factor
            pl.BlockSpec((chid, cout + 2), lambda i: (0, 0)),
            pl.BlockSpec((chid, 1), lambda i: (0, 0)),
            pl.BlockSpec((cout, chid), lambda i: (0, 0)),
            pl.BlockSpec((cout, 1), lambda i: (0, 0)),
        ]
        args += [
            x_in, df,
            sw1.T.astype(jnp.float32), sb1.reshape(chid, 1).astype(jnp.float32),
            sw2.T.astype(jnp.float32), sb2.reshape(cout, 1).astype(jnp.float32),
        ]

    kernel = functools.partial(
        _conv3x3_kernel, act=act, has_skip=skip is not None,
        has_se=se is not None, cin=cin, cin_p=cin_p, width=width, pad=pad)

    return pl.pallas_call(
        kernel,
        out_shape=jax.ShapeDtypeStruct((n, cout, hw), out_dtype),
        grid=(n,),
        in_specs=in_specs,
        out_specs=pl.BlockSpec((None, cout, hw), lambda i: (i, 0, 0)),
        scratch_shapes=[
            pltpu.VMEM((cin, hw + 2 * pad), cdt),      # row-padded image copy
            pltpu.VMEM((9 * cin_p, hw), cdt),          # im2col slab
        ],
        compiler_params=_compiler_params(),
    )(*args)


# ------------------------------- misc glue ----------------------------------

def pixel_shuffle_nc(x, h, w, r):
    """PixelShuffle on (N, C*r*r, h*w) -> (N, C, (h*r)*(w*r)); torch ordering."""
    # TODO(synk): fold into the upsampler conv's output index_map instead of
    #             an XLA reshape/transpose round trip.
    n, c4, _ = x.shape
    c = c4 // (r * r)
    x = x.reshape(n, c, r, r, h, w)
    x = jnp.transpose(x, (0, 1, 4, 2, 5, 3))
    return x.reshape(n, c, h * r * w * r)


# ----------------------------- parameter init -------------------------------

def init_params(key, num_filters=32, num_resblocks=2, scale_factor=4, se_r=16):
    f = num_filters
    keys = iter(jax.random.split(key, 64))

    def conv(cin, cout, k=3):
        wk = jax.random.normal(next(keys), (k * k, cin, cout), jnp.float32)
        wk = wk * (0.5 / math.sqrt(k * k * cin))
        bk = jax.random.normal(next(keys), (cout,), jnp.float32) * 0.01
        return wk, bk

    params = {}
    params["conv1_w"], params["conv1_b"] = conv(3, f)
    blocks = []
    for _ in range(num_resblocks):
        w1, b1 = conv(f, f)
        w2, b2 = conv(f, f)
        sw1, sb1 = conv(f + 2, f // se_r, k=1)
        sw2, sb2 = conv(f // se_r, f, k=1)
        blocks.append(dict(w1=w1, b1=b1, w2=w2, b2=b2,
                           se_w1=sw1[0], se_b1=sb1,
                           se_w2=sw2[0], se_b2=sb2))
    params["res_blocks"] = blocks
    params["conv2_w"], params["conv2_b"] = conv(f, f)
    ups = []
    for _ in range(int(math.log(scale_factor, 2))):
        w, b = conv(f, f * 4)
        ups.append(dict(w=w, b=b))
    params["upsampler"] = ups
    params["conv3_w"], params["conv3_b"] = conv(f, 3)
    return params


# ------------------------------ model forward -------------------------------

def edsr2_forward(params, x_nchw, down_factor):
    # x_nchw: (N, 3, H, W); down_factor: (N, 2, 1, 1)  -- PyTorch interface.
    n, c_in, h, w = x_nchw.shape
    x = x_nchw.reshape(n, c_in, h * w).astype(jnp.bfloat16)     # NC(HW), bf16
    df = down_factor.reshape(n, 2, 1).astype(jnp.float32)

    feat0 = conv3x3(x, params["conv1_w"], params["conv1_b"], h, w)
    feat = feat0
    for blk in params["res_blocks"]:
        r1 = conv3x3(feat, blk["w1"], blk["b1"], h, w, act="relu")
        # second conv of the res-block: conv + fused SE + residual add
        feat = conv3x3(r1, blk["w2"], blk["b2"], h, w,
                       se=(feat, df, blk["se_w1"], blk["se_b1"],
                           blk["se_w2"], blk["se_b2"]))
        # note: ResBlock2.res_scale is unused in the reference forward -> matched.

    res = conv3x3(feat, params["conv2_w"], params["conv2_b"], h, w, skip=feat0)

    up, hh, ww = res, h, w
    for ub in params["upsampler"]:
        up = conv3x3(up, ub["w"], ub["b"], hh, ww)      # isAct=False -> no ReLU
        up = pixel_shuffle_nc(up, hh, ww, 2)
        hh, ww = hh * 2, ww * 2
    out = conv3x3(up, params["conv3_w"], params["conv3_b"], hh, ww, act="tanh",
                  out_dtype=jnp.float32)
    return out.reshape(n, 3, hh, ww)                     # NCHW, [-1, 1]


# ------------------------------ reference (check) ----------------------------

def _conv3x3_reference(x_nchw, w, b):
    # x: (N, Cin, H, W); w: (9, Cin, Cout); 'same' 3x3 conv.
    n, cin, h, wd = x_nchw.shape
    xp = jnp.pad(x_nchw, ((0, 0), (0, 0), (1, 1), (1, 1)))
    taps = [xp[:, :, kh:kh + h, kw:kw + wd] for kh in range(3) for kw in range(3)]
    t = jnp.stack(taps, axis=1)                       # (n, 9, cin, h, w)
    return jnp.einsum("nkchw,kco->nohw", t, w) + b[None, :, None, None]


if __name__ == "__main__":
    key = jax.random.PRNGKey(0)
    ks = jax.random.split(key, 16)

    H = W = 8

    # --- unit check: plain conv (lane-dense NC(HW) layout) ---
    xc = jax.random.normal(ks[0], (2, 16, H, W), jnp.float32)
    wc = jax.random.normal(ks[1], (9, 16, 32), jnp.float32) * 0.05
    bc = jax.random.normal(ks[2], (32,), jnp.float32) * 0.1
    yk = conv3x3(xc.reshape(2, 16, H * W), wc, bc, H, W)
    yr = _conv3x3_reference(xc, wc, bc)
    assert jnp.allclose(yk.reshape(2, 32, H, W), yr, atol=5e-2, rtol=5e-2)

    # --- unit check: relu + fused skip-add path ---
    sk = jax.random.normal(ks[3], (2, 32, H, W), jnp.float32)
    yk2 = conv3x3(xc.reshape(2, 16, H * W), wc, bc, H, W, act="relu",
                  skip=sk.reshape(2, 32, H * W))
    yr2 = jnp.maximum(yr, 0.0) + sk
    assert jnp.allclose(yk2.reshape(2, 32, H, W), yr2, atol=5e-2, rtol=5e-2)

    # --- unit check: fused SE (pool + MLP + sigmoid) + residual add ---
    xin = jax.random.normal(ks[4], (2, 32, H, W), jnp.float32)
    dfu = jax.random.uniform(ks[5], (2, 2, 1), jnp.float32, 1.0, 4.0)
    w1 = jax.random.normal(ks[6], (34, 2), jnp.float32) * 0.3
    b1 = jax.random.normal(ks[7], (2,), jnp.float32) * 0.1
    w2 = jax.random.normal(ks[8], (2, 32), jnp.float32) * 0.3
    b2 = jax.random.normal(ks[9], (32,), jnp.float32) * 0.1
    wc2 = jax.random.normal(ks[10], (9, 32, 32), jnp.float32) * 0.05
    got = conv3x3(xin.reshape(2, 32, H * W), wc2, bc, H, W,
                  se=(xin.reshape(2, 32, H * W), dfu, w1, b1, w2, b2))
    yref = _conv3x3_reference(xin, wc2, bc)
    pooled = jnp.mean(yref, axis=(2, 3))
    s_in = jnp.concatenate([pooled, dfu.reshape(2, 2)], axis=1)
    sev = jax.nn.sigmoid(jnp.maximum(s_in @ w1 + b1, 0.0) @ w2 + b2)
    want = xin + yref * sev[:, :, None, None]
    assert jnp.allclose(got.reshape(2, 32, H, W), want, atol=5e-2, rtol=5e-2)

    # --- full model forward (32 filters, 2 res-blocks, x4 upscale) ---
    params = init_params(ks[11], num_filters=32, num_resblocks=2,
                         scale_factor=4, se_r=16)
    x = jax.random.normal(ks[12], (2, 3, 8, 8), jnp.float32)
    down_factor = jax.random.uniform(ks[13], (2, 2, 1, 1), jnp.float32, 1.0, 4.0)

    fwd = jax.jit(edsr2_forward)
    out = jax.block_until_ready(fwd(params, x, down_factor))

    assert out.shape == (2, 3, 32, 32), out.shape
    assert bool(jnp.all(jnp.isfinite(out)))
    assert bool(jnp.all(jnp.abs(out) <= 1.0 + 1e-5))   # tanh output range
    print("KERNEL_OK")
</pallas_src>

<mosaic_0001>
module attributes {stable_mosaic.version = 11 : i64} {
  func.func @_conv3x3_kernel(%arg0: i32, %arg1: memref<1x16x64xf32, #tpu.memory_space<vmem>>, %arg2: memref<32x144xf32, #tpu.memory_space<vmem>>, %arg3: memref<32x1xf32, #tpu.memory_space<vmem>>, %arg4: memref<1x32x64xf32, #tpu.memory_space<vmem>>, %arg5: memref<16x320xf32, #tpu.memory_space<vmem>>, %arg6: memref<144x64xf32, #tpu.memory_space<vmem>>) attributes {dimension_semantics = [#tpu.dimension_semantics<parallel>], iteration_bounds = array<i64: 2>, scalar_prefetch = 0 : i64, scratch_operands = 2 : i64, tpu.core_type = #tpu.core_type<tc>, window_params = [{transform_indices = @transform_0, window_bounds = array<i64: 1, 16, 64>}, {pipeline_mode = #tpu.pipeline_mode<synchronous>, transform_indices = @transform_1, window_bounds = array<i64: 32, 144>}, {pipeline_mode = #tpu.pipeline_mode<synchronous>, transform_indices = @transform_2, window_bounds = array<i64: 32, 1>}, {transform_indices = @transform_3, window_bounds = array<i64: 1, 32, 64>}]} {
    %cst = arith.constant 0.000000e+00 : f32
    %0 = vector.broadcast %cst : f32 to vector<16x128xf32>
    %c0 = arith.constant 0 : index
    %c0_0 = arith.constant 0 : index
    %1 = vector.load %arg5[%c0, %c0_0] : memref<16x320xf32, #tpu.memory_space<vmem>>, vector<16x128xf32>
    tpu.vector_store %arg5[%c0, %c0_0], %0 {strides = array<i32>} : memref<16x320xf32, #tpu.memory_space<vmem>>, vector<16x128xf32>,
    %cst_1 = arith.constant 0.000000e+00 : f32
    %2 = vector.broadcast %cst_1 : f32 to vector<16x128xf32>
    %c0_2 = arith.constant 0 : index
    %c192 = arith.constant 192 : index
    %3 = vector.load %arg5[%c0_2, %c192] : memref<16x320xf32, #tpu.memory_space<vmem>>, vector<16x128xf32>
    tpu.vector_store %arg5[%c0_2, %c192], %2 {strides = array<i32>} : memref<16x320xf32, #tpu.memory_space<vmem>>, vector<16x128xf32>,
    %c0_3 = arith.constant 0 : index
    %c0_4 = arith.constant 0 : index
    %c0_5 = arith.constant 0 : index
    %4 = vector.load %arg1[%c0_3, %c0_4, %c0_5] : memref<1x16x64xf32, #tpu.memory_space<vmem>>, vector<1x16x64xf32>
    %5 = vector.shape_cast %4 : vector<1x16x64xf32> to vector<16x64xf32>
    %c0_6 = arith.constant 0 : index
    %c128 = arith.constant 128 : index
    %6 = vector.load %arg5[%c0_6, %c128] : memref<16x320xf32, #tpu.memory_space<vmem>>, vector<16x64xf32>
    tpu.vector_store %arg5[%c0_6, %c128], %5 {strides = array<i32>} : memref<16x320xf32, #tpu.memory_space<vmem>>, vector<16x64xf32>,
    %7 = tpu.iota {dimensions = array<i32: 1>} : vector<1x64xi32>
    %c8_i32 = arith.constant 8 : i32
    %c0_i32 = arith.constant 0 : i32
    %8 = arith.cmpi eq, %c8_i32, %c0_i32 : i32
    %c1_i32 = arith.constant 1 : i32
    %9 = arith.select %8, %c1_i32, %c8_i32 : i32
    %10 = vector.broadcast %9 : i32 to vector<1x64xi32>
    %11 = arith.remsi %7, %10 : vector<1x64xi32>
    %c0_i32_7 = arith.constant 0 : i32
    %12 = vector.broadcast %c0_i32_7 : i32 to vector<1x64xi32>
    %13 = arith.cmpi ne, %11, %12 : vector<1x64xi32>
    %c0_i32_8 = arith.constant 0 : i32
    %14 = vector.broadcast %c0_i32_8 : i32 to vector<1x64xi32>
    %15 = arith.cmpi slt, %11, %14 : vector<1x64xi32>
    %c0_i32_9 = arith.constant 0 : i32
    %16 = arith.cmpi slt, %9, %c0_i32_9 : i32
    %17 = vector.broadcast %16 : i1 to vector<1x64xi1>
    %18 = vector.broadcast %17 : vector<1x64xi1> to vector<1x64xi1>
    %19 = arith.xori %15, %18 : vector<1x64xi1>
    %20 = arith.andi %19, %13 : vector<1x64xi1>
    %21 = vector.broadcast %9 : i32 to vector<1x64xi32>
    %22 = arith.addi %11, %21 : vector<1x64xi32>
    %23 = arith.select %20, %22, %11 : vector<1x64xi1>, vector<1x64xi32>
    %c0_10 = arith.constant 0 : index
    %c119 = arith.constant 119 : index
    %24 = vector.load %arg5[%c0_10, %c119] : memref<16x320xf32, #tpu.memory_space<vmem>>, vector<16x64xf32>
    %c0_i32_11 = arith.constant 0 : i32
    %25 = vector.broadcast %c0_i32_11 : i32 to vector<1x64xi32>
    %26 = arith.cmpi ne, %23, %25 : vector<1x64xi32>
    %c0_i32_12 = arith.constant 0 : i32
    %27 = arith.sitofp %c0_i32_12 : i32 to f32
    %28 = vector.shape_cast %26 : vector<1x64xi1> to vector<1x64xi1>
    %29 = vector.broadcast %28 : vector<1x64xi1> to vector<16x64xi1>
    %30 = vector.broadcast %27 : f32 to vector<16x64xf32>
    %31 = arith.select %29, %24, %30 : vector<16x64xi1>, vector<16x64xf32>
    %c0_13 = arith.constant 0 : index
    %c0_14 = arith.constant 0 : index
    %32 = vector.load %arg6[%c0_13, %c0_14] : memref<144x64xf32, #tpu.memory_space<vmem>>, vector<16x64xf32>
    tpu.vector_store %arg6[%c0_13, %c0_14], %31 {strides = array<i32>} : memref<144x64xf32, #tpu.memory_space<vmem>>, vector<16x64xf32>,
    %c0_15 = arith.constant 0 : index
    %c120 = arith.constant 120 : index
    %33 = vector.load %arg5[%c0_15, %c120] : memref<16x320xf32, #tpu.memory_space<vmem>>, vector<16x64xf32>
    %c16 = arith.constant 16 : index
    %c0_16 = arith.constant 0 : index
    %34 = vector.load %arg6[%c16, %c0_16] : memref<144x64xf32, #tpu.memory_space<vmem>>, vector<16x64xf32>
    tpu.vector_store %arg6[%c16, %c0_16], %33 {strides = array<i32>} : memref<144x64xf32, #tpu.memory_space<vmem>>, vector<16x64xf32>,
    %c0_17 = arith.constant 0 : index
    %c121 = arith.constant 121 : index
    %35 = vector.load %arg5[%c0_17, %c121] : memref<16x320xf32, #tpu.memory_space<vmem>>, vector<16x64xf32>
    %c7_i32 = arith.constant 7 : i32
    %36 = vector.broadcast %c7_i32 : i32 to vector<1x64xi32>
    %37 = arith.cmpi ne, %23, %36 : vector<1x64xi32>
    %c0_i32_18 = arith.constant 0 : i32
    %38 = arith.sitofp %c0_i32_18 : i32 to f32
    %39 = vector.shape_cast %37 : vector<1x64xi1> to vector<1x64xi1>
    %40 = vector.broadcast %39 : vector<1x64xi1> to vector<16x64xi1>
    %41 = vector.broadcast %38 : f32 to vector<16x64xf32>
    %42 = arith.select %40, %35, %41 : vector<16x64xi1>, vector<16x64xf32>
    %c32 = arith.constant 32 : index
    %c0_19 = arith.constant 0 : index
    %43 = vector.load %arg6[%c32, %c0_19] : memref<144x64xf32, #tpu.memory_space<vmem>>, vector<16x64xf32>
    tpu.vector_store %arg6[%c32, %c0_19], %42 {strides = array<i32>} : memref<144x64xf32, #tpu.memory_space<vmem>>, vector<16x64xf32>,
    %c0_20 = arith.constant 0 : index
    %c127 = arith.constant 127 : index
    %44 = vector.load %arg5[%c0_20, %c127] : memref<16x320xf32, #tpu.memory_space<vmem>>, vector<16x64xf32>
    %c0_i32_21 = arith.constant 0 : i32
    %45 = vector.broadcast %c0_i32_21 : i32 to vector<1x64xi32>
    %46 = arith.cmpi ne, %23, %45 : vector<1x64xi32>
    %c0_i32_22 = arith.constant 0 : i32
    %47 = arith.sitofp %c0_i32_22 : i32 to f32
    %48 = vector.shape_cast %46 : vector<1x64xi1> to vector<1x64xi1>
    %49 = vector.broadcast %48 : vector<1x64xi1> to vector<16x64xi1>
    %50 = vector.broadcast %47 : f32 to vector<16x64xf32>
    %51 = arith.select %49, %44, %50 : vector<16x64xi1>, vector<16x64xf32>
    %c48 = arith.constant 48 : index
    %c0_23 = arith.constant 0 : index
    %52 = vector.load %arg6[%c48, %c0_23] : memref<144x64xf32, #tpu.memory_space<vmem>>, vector<16x64xf32>
    tpu.vector_store %arg6[%c48, %c0_23], %51 {strides = array<i32>} : memref<144x64xf32, #tpu.memory_space<vmem>>, vector<16x64xf32>,
    %c0_24 = arith.constant 0 : index
    %c128_25 = arith.constant 128 : index
    %53 = vector.load %arg5[%c0_24, %c128_25] : memref<16x320xf32, #tpu.memory_space<vmem>>, vector<16x64xf32>
    %c64 = arith.constant 64 : index
    %c0_26 = arith.constant 0 : index
    %54 = vector.load %arg6[%c64, %c0_26] : memref<144x64xf32, #tpu.memory_space<vmem>>, vector<16x64xf32>
    tpu.vector_store %arg6[%c64, %c0_26], %53 {strides = array<i32>} : memref<144x64xf32, #tpu.memory_space<vmem>>, vector<16x64xf32>,
    %c0_27 = arith.constant 0 : index
    %c129 = arith.constant 129 : index
    %55 = vector.load %arg5[%c0_27, %c129] : memref<16x320xf32, #tpu.memory_space<vmem>>, vector<16x64xf32>
    %c7_i32_28 = arith.constant 7 : i32
    %56 = vector.broadcast %c7_i32_28 : i32 to vector<1x64xi32>
    %57 = arith.cmpi ne, %23, %56 : vector<1x64xi32>
    %c0_i32_29 = arith.constant 0 : i32
    %58 = arith.sitofp %c0_i32_29 : i32 to f32
    %59 = vector.shape_cast %57 : vector<1x64xi1> to vector<1x64xi1>
    %60 = vector.broadcast %59 : vector<1x64xi1> to vector<16x64xi1>
    %61 = vector.broadcast %58 : f32 to vector<16x64xf32>
    %62 = arith.select %60, %55, %61 : vector<16x64xi1>, vector<16x64xf32>
    %c80 = arith.constant 80 : index
    %c0_30 = arith.constant 0 : index
    %63 = vector.load %arg6[%c80, %c0_30] : memref<144x64xf32, #tpu.memory_space<vmem>>, vector<16x64xf32>
    tpu.vector_store %arg6[%c80, %c0_30], %62 {strides = array<i32>} : memref<144x64xf32, #tpu.memory_space<vmem>>, vector<16x64xf32>,
    %c0_31 = arith.constant 0 : index
    %c135 = arith.constant 135 : index
    %64 = vector.load %arg5[%c0_31, %c135] : memref<16x320xf32, #tpu.memory_space<vmem>>, vector<16x64xf32>
    %c0_i32_32 = arith.constant 0 : i32
    %65 = vector.broadcast %c0_i32_32 : i32 to vector<1x64xi32>
    %66 = arith.cmpi ne, %23, %65 : vector<1x64xi32>
    %c0_i32_33 = arith.constant 0 : i32
    %67 = arith.sitofp %c0_i32_33 : i32 to f32
    %68 = vector.shape_cast %66 : vector<1x64xi1> to vector<1x64xi1>
    %69 = vector.broadcast %68 : vector<1x64xi1> to vector<16x64xi1>
    %70 = vector.broadcast %67 : f32 to vector<16x64xf32>
    %71 = arith.select %69, %64, %70 : vector<16x64xi1>, vector<16x64xf32>
    %c96 = arith.constant 96 : index
    %c0_34 = arith.constant 0 : index
    %72 = vector.load %arg6[%c96, %c0_34] : memref<144x64xf32, #tpu.memory_space<vmem>>, vector<16x64xf32>
    tpu.vector_store %arg6[%c96, %c0_34], %71 {strides = array<i32>} : memref<144x64xf32, #tpu.memory_space<vmem>>, vector<16x64xf32>,
    %c0_35 = arith.constant 0 : index
    %c136 = arith.constant 136 : index
    %73 = vector.load %arg5[%c0_35, %c136] : memref<16x320xf32, #tpu.memory_space<vmem>>, vector<16x64xf32>
    %c112 = arith.constant 112 : index
    %c0_36 = arith.constant 0 : index
    %74 = vector.load %arg6[%c112, %c0_36] : memref<144x64xf32, #tpu.memory_space<vmem>>, vector<16x64xf32>
    tpu.vector_store %arg6[%c112, %c0_36], %73 {strides = array<i32>} : memref<144x64xf32, #tpu.memory_space<vmem>>, vector<16x64xf32>,
    %c0_37 = arith.constant 0 : index
    %c137 = arith.constant 137 : index
    %75 = vector.load %arg5[%c0_37, %c137] : memref<16x320xf32, #tpu.memory_space<vmem>>, vector<16x64xf32>
    %c7_i32_38 = arith.constant 7 : i32
    %76 = vector.broadcast %c7_i32_38 : i32 to vector<1x64xi32>
    %77 = arith.cmpi ne, %23, %76 : vector<1x64xi32>
    %c0_i32_39 = arith.constant 0 : i32
    %78 = arith.sitofp %c0_i32_39 : i32 to f32
    %79 = vector.shape_cast %77 : vector<1x64xi1> to vector<1x64xi1>
    %80 = vector.broadcast %79 : vector<1x64xi1> to vector<16x64xi1>
    %81 = vector.broadcast %78 : f32 to vector<16x64xf32>
    %82 = arith.select %80, %75, %81 : vector<16x64xi1>, vector<16x64xf32>
    %c128_40 = arith.constant 128 : index
    %c0_41 = arith.constant 0 : index
    %83 = vector.load %arg6[%c128_40, %c0_41] : memref<144x64xf32, #tpu.memory_space<vmem>>, vector<16x64xf32>
    tpu.vector_store %arg6[%c128_40, %c0_41], %82 {strides = array<i32>} : memref<144x64xf32, #tpu.memory_space<vmem>>, vector<16x64xf32>,
    %c0_42 = arith.constant 0 : index
    %c0_43 = arith.constant 0 : index
    %84 = vector.load %arg2[%c0_42, %c0_43] : memref<32x144xf32, #tpu.memory_space<vmem>>, vector<32x144xf32>
    %c0_44 = arith.constant 0 : index
    %c0_45 = arith.constant 0 : index
    %85 = vector.load %arg6[%c0_44, %c0_45] : memref<144x64xf32, #tpu.memory_space<vmem>>, vector<144x64xf32>
    %cst_46 = arith.constant dense<0.000000e+00> : vector<32x64xf32>
    %86 = tpu.matmul %84, %85, %cst_46 {dimension_numbers = #tpu.dot_dimension_numbers<[1], [0], [0], [1], [0, 0, 1, 1], [], []>} : vector<32x144xf32>, vector<144x64xf32>, vector<32x64xf32> -> vector<32x64xf32>
    %c0_47 = arith.constant 0 : index
    %c0_48 = arith.constant 0 : index
    %87 = vector.load %arg3[%c0_47, %c0_48] : memref<32x1xf32, #tpu.memory_space<vmem>>, vector<32x1xf32>
    %88 = vector.broadcast %87 : vector<32x1xf32> to vector<32x64xf32>
    %89 = arith.addf %86, %88 : vector<32x64xf32>
    %c0_49 = arith.constant 0 : index
    %c0_50 = arith.constant 0 : index
    %c0_51 = arith.constant 0 : index
    %90 = vector.load %arg4[%c0_49, %c0_50, %c0_51] : memref<1x32x64xf32, #tpu.memory_space<vmem>>, vector<1x32x64xf32>
    %91 = vector.shape_cast %90 : vector<1x32x64xf32> to vector<32x64xf32>
    %92 = vector.shape_cast %89 : vector<32x64xf32> to vector<1x32x64xf32>
    tpu.vector_store %arg4[%c0_49, %c0_50, %c0_51], %92 {strides = array<i32>} : memref<1x32x64xf32, #tpu.memory_space<vmem>>, vector<1x32x64xf32>,
    return
  }
  func.func @transform_0(%arg0: i32) -> (i32, i32, i32) {
    %c0_i32 = arith.constant 0 : i32
    %c0_i32_0 = arith.constant 0 : i32
    %c0_i32_1 = arith.constant 0 : i32
    return %arg0, %c0_i32, %c0_i32_0 : i32, i32, i32
  }
  func.func @transform_1(%arg0: i32) -> (i32, i32) {
    %c0_i32 = arith.constant 0 : i32
    %c0_i32_0 = arith.constant 0 : i32
    %c0_i32_1 = arith.constant 0 : i32
    return %c0_i32, %c0_i32_0 : i32, i32
  }
  func.func @transform_2(%arg0: i32) -> (i32, i32) {
    %c0_i32 = arith.constant 0 : i32
    %c0_i32_0 = arith.constant 0 : i32
    %c0_i32_1 = arith.constant 0 : i32
    return %c0_i32, %c0_i32_0 : i32, i32
  }
  func.func @transform_3(%arg0: i32) -> (i32, i32, i32) {
    %c0_i32 = arith.constant 0 : i32
    %c0_i32_0 = arith.constant 0 : i32
    %c0_i32_1 = arith.constant 0 : i32
    return %arg0, %c0_i32, %c0_i32_0 : i32, i32, i32
  }
}

</mosaic_0001>

<llo_original>
// kernel: tpu_custom_call.1
$region0: #{tpu_custom_call.1}
  #allocation0 [shape = 'u32[]', space=smem, size = 0x4, offset = 0x4, fixed_abs, tag = 'smem constant byte address 0x4 - core index']
  #allocation1 [shape = 'u32[72,128]{1,0:T(1,128)}', space=vmem, size = 0x9000, scoped, tag = 'internal scratch']
  #allocation2 [shape = 'f32[16,320]{1,0:T(8,128)}', space=vmem, size = 0x6000, scoped, tag = 'scratch operand']
  #allocation3 [shape = 'f32[144,64]{1,0:T(8,128)}', space=vmem, size = 0x12000, scoped, tag = 'scratch operand']
  %s0 = inlined_call_operand.vmem [shape: f32[2,16,64], index: 0, kind: input, shape index: {}]
  %s1 = inlined_call_operand.hbm [shape: f32[32,144], index: 1, kind: input, shape index: {}]
  %s2 = inlined_call_operand.vmem [shape: f32[32,1], index: 2, kind: input, shape index: {}]
  %s3 = inlined_call_operand.hbm [shape: f32[2,32,64], index: 3, kind: output, shape index: {}]
  %s4 = sld [smem:[#allocation0]]
  $region49: #{tpu_custom_call.1} parent=0
    _
  %s6 = ssub.s32 1, %s4
  %s7 = scalar_select 0, %s6, %s4
  $region1: #{tpu_custom_call.1} parent=0
    #allocation4 [shape = 'u8[32768]{0}', space=vmem, size = 0x8000, scoped, tag = 'input window, operand 1, single buffered']
    #allocation5 [shape = 's32[2]{0}', space=sflag, size = 0x8, scoped, tag = 'scoped memory for tpu_custom_call.1']
    #allocation6 [shape = 's32[2]{0}', space=sflag, size = 0x8, scoped, tag = 'scoped memory for tpu_custom_call.1']
    #allocation7 [shape = 'u8[32768]{0}', space=vmem, size = 0x8000, scoped, tag = 'output window, operand 0']
    %8 = vsyncpa [#allocation5], 0
    %9 = vsyncpa [#allocation6], 0
    %s10 = scalar_lea.sflag [#allocation6], 1
    %11 = vsyncpa %s10, 0
    loop: start=0, step=1, limit=4
    $region2: #{tpu_custom_call.1} parent=1 // loop_pre_header
      _
    $region3: #{tpu_custom_call.1} parent=1 // loop_header
      %s13 = sphi 0, %s17
      %p14 = scmp.ge.s32.totalorder %s13, 4
      %s23 = sphi 0, %s25
      %s26 = sphi 0, %s23
      %s27 = sphi 0, %s26
      %s43 = sphi 0, %s27
      %s47 = sphi 0, %s47
      %s49 = sphi 0, %s47
      %s50 = sphi 0, %s49
      %s64 = sphi 0, %s50
      %s68 = sphi 0, %s68
      %s70 = sphi 0, %s68
      %s71 = sphi 0, %s70
      %s85 = sphi 0, %s71
      %s91 = sphi 0, %s93
      %s94 = sphi 0, %s91
      %s95 = sphi 0, %s94
      %s111 = sphi 0, %s95
    $region4: #{tpu_custom_call.1} parent=1 // loop_header_branch
      %16 = sbr.rel (%p14) target = $region8
    $region5: #{tpu_custom_call.1} parent=1 // loop_body
      %s18 = ssub.s32 %s13, 1
      %s19 = ssub.s32 %s13, 2
      %s20 = sadd.s32 %s13, 1
      %s21 = ssub.s32 %s13, %s20
      %p22 = scmp.eq.s32.totalorder %s21, 0
      %s24 = sadd.s32 %s23, 1
      %s25 = scalar_select %p22, %s23, %s24
      %p28 = pneg %p22
      %p29 = scmp.eq.s32.totalorder %s13, 1
      %p30 = por %p28, %p29
      %p31 = scmp.ne.s32.totalorder %s23, %s26
      %p32 = scmp.eq.s32.totalorder %s13, 0
      %p33 = por %p31, %p32
      %p34 = scmp.ne.s32.totalorder %s23, %s26
      %p35 = scmp.eq.s32.totalorder %s18, 1
      %p36 = por %p34, %p35
      %p37 = scmp.ne.s32.totalorder %s26, %s27
      %p38 = scmp.eq.s32.totalorder %s18, 0
      %p39 = por %p37, %p38
      %p40 = scmp.ne.s32.totalorder %s26, %s27
      %p41 = scmp.eq.s32.totalorder %s19, 1
      %p42 = por %p40, %p41
      %p44 = scmp.ne.s32.totalorder %s27, %s43
      %p45 = scmp.eq.s32.totalorder %s19, 0
      %p46 = por %p44, %p45
      %s48 = sadd.s32 %s47, 1
      %p51 = scmp.eq.s32.totalorder %s13, 1
      %p52 = scmp.ne.s32.totalorder %s47, %s49
      %p53 = scmp.eq.s32.totalorder %s13, 0
      %p54 = por %p52, %p53
      %p55 = scmp.ne.s32.totalorder %s47, %s49
      %p56 = scmp.eq.s32.totalorder %s18, 1
      %p57 = por %p55, %p56
      %p58 = scmp.ne.s32.totalorder %s49, %s50
      %p59 = scmp.eq.s32.totalorder %s18, 0
      %p60 = por %p58, %p59
      %p61 = scmp.ne.s32.totalorder %s49, %s50
      %p62 = scmp.eq.s32.totalorder %s19, 1
      %p63 = por %p61, %p62
      %p65 = scmp.ne.s32.totalorder %s50, %s64
      %p66 = scmp.eq.s32.totalorder %s19, 0
      %p67 = por %p65, %p66
      %s69 = sadd.s32 %s68, 1
      %p72 = scmp.eq.s32.totalorder %s13, 1
      %p73 = scmp.ne.s32.totalorder %s68, %s70
      %p74 = scmp.eq.s32.totalorder %s13, 0
      %p75 = por %p73, %p74
      %p76 = scmp.ne.s32.totalorder %s68, %s70
      %p77 = scmp.eq.s32.totalorder %s18, 1
      %p78 = por %p76, %p77
      %p79 = scmp.ne.s32.totalorder %s70, %s71
      %p80 = scmp.eq.s32.totalorder %s18, 0
      %p81 = por %p79, %p80
      %p82 = scmp.ne.s32.totalorder %s70, %s71
      %p83 = scmp.eq.s32.totalorder %s19, 1
      %p84 = por %p82, %p83
      %p86 = scmp.ne.s32.totalorder %s71, %s85
      %p87 = scmp.eq.s32.totalorder %s19, 0
      %p88 = por %p86, %p87
      %s89 = ssub.s32 %s13, %s20
      %p90 = scmp.eq.s32.totalorder %s89, 0
      %s92 = sadd.s32 %s91, 1
      %s93 = scalar_select %p90, %s91, %s92
      %p96 = pneg %p90
      %p97 = scmp.eq.s32.totalorder %s13, 1
      %p98 = por %p96, %p97
      %p99 = scmp.ne.s32.totalorder %s91, %s94
      %p100 = scmp.eq.s32.totalorder %s13, 0
      %p101 = por %p99, %p100
      %p102 = scmp.ne.s32.totalorder %s91, %s94
      %p103 = scmp.eq.s32.totalorder %s18, 1
      %p104 = por %p102, %p103
      %p105 = scmp.ne.s32.totalorder %s94, %s95
      %p106 = scmp.eq.s32.totalorder %s18, 0
      %p107 = por %p105, %p106
      %p108 = scmp.ne.s32.totalorder %s94, %s95
      %p109 = scmp.eq.s32.totalorder %s19, 1
      %p110 = por %p108, %p109
      %p112 = scmp.ne.s32.totalorder %s95, %s111
      %p113 = scmp.eq.s32.totalorder %s19, 0
      %p114 = por %p112, %p113
      %p115 = scmp.le.s32.totalorder 1, %s13
      %p116 = scmp.lt.s32.totalorder %s13, 3
      %p117 = pnand %p115, %p116
      %p118 = pneg %p117
      // Predicated region
      $region9: #{tpu_custom_call.1} parent=5 // pred_check
        _
      $region10: #{tpu_custom_call.1} parent=5 // pred_check_branch
        %120 = sbr.rel (%p117) target = $region12
      $region11: #{tpu_custom_call.1} parent=5 // pred_region
        %s121 = ssub.s32 %s13, 1
        // Predicated region
        $region13: #{tpu_custom_call.1} parent=11 // pred_check
          %p122 = pneg %p60
        $region14: #{tpu_custom_call.1} parent=11 // pred_check_branch
          %124 = sbr.rel (%p122) target = $region16
        $region15: #{tpu_custom_call.1} parent=11 // pred_region
          %126 = vsyncadd [#allocation5], 0
          %s127 = sshll.u32 %s1, 4
          %s128 = int_to_ptr.hbm [resolvable:$true] %s127
          %s129 = sshll.u32 [#allocation4], 4
          %s130 = int_to_ptr.vmem [resolvable:$true] %s129
          %135 = dma.hbm_to_vmem [thread:$0]  %s128, 1024, %s130, [#allocation5], 256, 256, 16
        $region16: #{tpu_custom_call.1} parent=11 // pred_fallthru
          _
        // Predicated region
        $region17: #{tpu_custom_call.1} parent=11 // pred_check
          %p136 = pneg %p81
        $region18: #{tpu_custom_call.1} parent=11 // pred_check_branch
          %138 = sbr.rel (%p136) target = $region20
        $region19: #{tpu_custom_call.1} parent=11 // pred_region
          _
        $region20: #{tpu_custom_call.1} parent=11 // pred_fallthru
          _
      $region12: #{tpu_custom_call.1} parent=5 // pred_fallthru
        _
      %p139 = scmp.lt.s32.totalorder %s13, 2
      // Predicated region
      $region21: #{tpu_custom_call.1} parent=5 // pred_check
        %p140 = pneg %p139
      $region22: #{tpu_custom_call.1} parent=5 // pred_check_branch
        %142 = sbr.rel (%p140) target = $region24
      $region23: #{tpu_custom_call.1} parent=5 // pred_region
        // Predicated region
        $region25: #{tpu_custom_call.1} parent=23 // pred_check
          %p143 = pneg %p33
        $region26: #{tpu_custom_call.1} parent=23 // pred_check_branch
          %145 = sbr.rel (%p143) target = $region28
        $region27: #{tpu_custom_call.1} parent=23 // pred_region
          %p146 = scmp.lt.s32.totalorder %s13, 1
          %s147 = scalar_select %p146, %s13, 1
          %s148 = smul.addr %s147, 2
          %s149 = smul.addr %s148, 8
          %s150 = scalar_lea.vmem %s0, %s149
        $region28: #{tpu_custom_call.1} parent=23 // pred_fallthru
          _
      $region24: #{tpu_custom_call.1} parent=5 // pred_fallthru
        _
      %p151 = scmp.le.s32.totalorder 1, %s13
      %p152 = scmp.lt.s32.totalorder %s13, 3
      %p153 = pnand %p151, %p152
      %p154 = pneg %p153
      // Predicated region
      $region29: #{tpu_custom_call.1} parent=5 // pred_check
        _
      $region30: #{tpu_custom_call.1} parent=5 // pred_check_branch
        %156 = sbr.rel (%p153) target = $region32
      $region31: #{tpu_custom_call.1} parent=5 // pred_region
        %s157 = ssub.s32 %s13, 1
        // Predicated region
        $region33: #{tpu_custom_call.1} parent=31 // pred_check
          %p158 = pneg %p60
        $region34: #{tpu_custom_call.1} parent=31 // pred_check_branch
          %160 = sbr.rel (%p158) target = $region36
        $region35: #{tpu_custom_call.1} parent=31 // pred_region
          %162 = dma.done [#allocation5], 1024
        $region36: #{tpu_custom_call.1} parent=31 // pred_fallthru
          _
        %p163 = scmp.lt.s32.totalorder %s18, 1
        %s164 = scalar_select %p163, %s18, 1
        %s165 = smul.addr %s164, 2
        %s166 = smul.addr %s165, 8
        %s167 = scalar_lea.vmem %s0, %s166
        %p168 = pneg %p39
        %p169 = pneg %p36
        %p170 = pneg %p60
        %p171 = pneg %p57
        %p172 = pneg %p81
        %p173 = pneg %p78
        %p174 = pneg %p107
        %p175 = pneg %p104
        %s176 = sand.u32 %s94, 1
        %s177 = scalar_lea.sflag [#allocation6], %s176
        %s178 = sand.u32 %s94, 1
        %s179 = smul.addr %s178, 32
        %s180 = scalar_lea.vmem [#allocation7], %s179
        %p181 = scmp.lt.s32.totalorder %s18, 1
        %s182 = scalar_select %p181, %s18, 1
        %s183 = smul.addr %s182, 2
        %s184 = smul.addr %s183, 8
        %s185 = scalar_lea.vmem %s0, %s184
        %186 = vst [vmem:[#allocation2] sm:$0xff] 0.0
        %187 = vst [vmem:[#allocation2 + $0x18] sm:$0xff] 0.0
        %vm188 = vcmask 1048064
        %189 = vst.msk [vmem:[#allocation2 + $0x8] sm:$0xff] %vm188, 0.0
        %vm190 = vcmask 523264
        %191 = vst.msk [vmem:[#allocation2 + $0x10] sm:$0xff] %vm190, 0.0
        %192 = vst.msk [vmem:[#allocation2 + $0x20] sm:$0xff] %vm188, 0.0
        %193 = vst.msk [vmem:[#allocation2 + $0x28] sm:$0xff] %vm190, 0.0
        %v194 = vld [vmem:[%s185] sm:$0xff]
        %v195 = vld [vmem:[%s185 + $0x8] sm:$0xff]
        %196 = vst.msk [vmem:[#allocation2 + $0x8] sm:$0xff] %vm190, %v194
        %197 = vst.msk [vmem:[#allocation2 + $0x20] sm:$0xff] %vm190, %v195
        %v198 = vlaneseq
        %v199 = vand.u32 %v198, 127
        %vm200 = vcmp.lt.s32.totalorder %v199, 0
        %v201 = vsub.s32 0, %v199
        %v202 = vsel %vm200, %v201, %v199
        %v203 = vshrl.u32 %v202, 3
        %v204 = vand.u32 %v202, 7
        %v205 = vsub.s32 0, %v204
        %v206 = vsel %vm200, %v205, %v204
        %vm207 = vcmp.ne.s32.totalorder %v206, 0
        %vm208 = vcmp.lt.s32.totalorder %v206, 0
        %vm209 = vmand %vm208, %vm207
        %v210 = vadd.s32 %v206, 8
        %v211 = vsel %vm209, %v210, %v206
        %v212 = vld [vmem:[#allocation2] sm:$0xff]
        %v213 = vld [vmem:[#allocation2 + $0x8] sm:$0xff]
        %v214 = vld [vmem:[#allocation2 + $0x18] sm:$0xff]
        %v215 = vld [vmem:[#allocation2 + $0x20] sm:$0xff]
        %vm216 = vcmp.ne.s32.totalorder %v211, 0
        %v217 = vsel %vm216, 1, 0
        %vm218 = vcmp.eq.s32.totalorder %v217, 1
        %223 = vrot.lane.b32.xlu0 %v212, 9
        %v224 = vpop.permute.xlu0 %223
        %225 = vrot.lane.b32.xlu0 %v213, 9
        %v226 = vpop.permute.xlu0 %225
        %227 = vrot.lane.b32.xlu0 %v214, 9
        %v228 = vpop.permute.xlu0 %227
        %229 = vrot.lane.b32.xlu0 %v215, 9
        %v230 = vpop.permute.xlu0 %229
        %vm231 = vcmask 72704
        %v232 = vsel %vm231, %v224, %v226
        %v233 = vsel %vm231, %v228, %v230
        %v236 = vsel %vm218, %v232, 0.0
        %v237 = vsel %vm218, %v233, 0.0
        %238 = vst.msk [vmem:[#allocation3] sm:$0xff] %vm190, %v236
        %239 = vst.msk [vmem:[#allocation3 + $0x8] sm:$0xff] %vm190, %v237
        %v240 = vld [vmem:[#allocation2] sm:$0xff]
        %v241 = vld [vmem:[#allocation2 + $0x8] sm:$0xff]
        %v242 = vld [vmem:[#allocation2 + $0x18] sm:$0xff]
        %v243 = vld [vmem:[#allocation2 + $0x20] sm:$0xff]
        %248 = vrot.lane.b32.xlu0 %v240, 8
        %v249 = vpop.permute.xlu0 %248
        %250 = vrot.lane.b32.xlu0 %v241, 8
        %v251 = vpop.permute.xlu0 %250
        %252 = vrot.lane.b32.xlu0 %v242, 8
        %v253 = vpop.permute.xlu0 %252
        %254 = vrot.lane.b32.xlu0 %v243, 8
        %v255 = vpop.permute.xlu0 %254
        %vm256 = vcmask 64512
        %v257 = vsel %vm256, %v249, %v251
        %v258 = vsel %vm256, %v253, %v255
        %261 = vst.msk [vmem:[#allocation3 + $0x10] sm:$0xff] %vm190, %v257
        %262 = vst.msk [vmem:[#allocation3 + $0x18] sm:$0xff] %vm190, %v258
        %v263 = vld [vmem:[#allocation2] sm:$0xff]
        %v264 = vld [vmem:[#allocation2 + $0x8] sm:$0xff]
        %v265 = vld [vmem:[#allocation2 + $0x18] sm:$0xff]
        %v266 = vld [vmem:[#allocation2 + $0x20] sm:$0xff]
        %vm267 = vcmp.ne.s32.totalorder %v211, 7
        %v268 = vsel %vm267, 1, 0
        %vm269 = vcmp.eq.s32.totalorder %v268, 1
        %274 = vrot.lane.b32.xlu0 %v263, 7
        %v275 = vpop.permute.xlu0 %274
        %276 = vrot.lane.b32.xlu0 %v264, 7
        %v277 = vpop.permute.xlu0 %276
        %278 = vrot.lane.b32.xlu0 %v265, 7
        %v279 = vpop.permute.xlu0 %278
        %280 = vrot.lane.b32.xlu0 %v266, 7
        %v281 = vpop.permute.xlu0 %280
        %vm282 = vcmask 56320
        %v283 = vsel %vm282, %v275, %v277
        %v284 = vsel %vm282, %v279, %v281
        %v287 = vsel %vm269, %v283, 0.0
        %v288 = vsel %vm269, %v284, 0.0
        %289 = vst.msk [vmem:[#allocation3 + $0x20] sm:$0xff] %vm190, %v287
        %290 = vst.msk [vmem:[#allocation3 + $0x28] sm:$0xff] %vm190, %v288
        %v291 = vld [vmem:[#allocation2] sm:$0xff]
        %v292 = vld [vmem:[#allocation2 + $0x8] sm:$0xff]
        %v293 = vld [vmem:[#allocation2 + $0x18] sm:$0xff]
        %v294 = vld [vmem:[#allocation2 + $0x20] sm:$0xff]
        %299 = vrot.lane.b32.xlu0 %v291, 1
        %v300 = vpop.permute.xlu0 %299
        %301 = vrot.lane.b32.xlu0 %v292, 1
        %v302 = vpop.permute.xlu0 %301
        %303 = vrot.lane.b32.xlu0 %v293, 1
        %v304 = vpop.permute.xlu0 %303
        %305 = vrot.lane.b32.xlu0 %v294, 1
        %v306 = vpop.permute.xlu0 %305
        %vm307 = vcmask 7168
        %v308 = vsel %vm307, %v300, %v302
        %v309 = vsel %vm307, %v304, %v306
        %v312 = vsel %vm218, %v308, 0.0
        %v313 = vsel %vm218, %v309, 0.0
        %314 = vst.msk [vmem:[#allocation3 + $0x30] sm:$0xff] %vm190, %v312
        %315 = vst.msk [vmem:[#allocation3 + $0x38] sm:$0xff] %vm190, %v313
        %v316 = vld [vmem:[#allocation2 + $0x8] sm:$0xff]
        %v317 = vld [vmem:[#allocation2 + $0x20] sm:$0xff]
        %318 = vst.msk [vmem:[#allocation3 + $0x40] sm:$0xff] %vm190, %v316
        %319 = vst.msk [vmem:[#allocation3 + $0x48] sm:$0xff] %vm190, %v317
        %v320 = vld [vmem:[#allocation2 + $0x8] sm:$0xff]
        %v321 = vld [vmem:[#allocation2 + $0x20] sm:$0xff]
        %324 = vrot.lane.b32.xlu0 %v320, 127
        %v325 = vpop.permute.xlu0 %324
        %326 = vrot.lane.b32.xlu0 %v321, 127
        %v327 = vpop.permute.xlu0 %326
        %v330 = vsel %vm269, %v325, 0.0
        %v331 = vsel %vm269, %v327, 0.0
        %332 = vst.msk [vmem:[#allocation3 + $0x50] sm:$0xff] %vm190, %v330
        %333 = vst.msk [vmem:[#allocation3 + $0x58] sm:$0xff] %vm190, %v331
        %v334 = vld [vmem:[#allocation2 + $0x8] sm:$0xff]
        %v335 = vld [vmem:[#allocation2 + $0x20] sm:$0xff]
        %338 = vrot.lane.b32.xlu0 %v334, 121
        %v339 = vpop.permute.xlu0 %338
        %340 = vrot.lane.b32.xlu0 %v335, 121
        %v341 = vpop.permute.xlu0 %340
        %v344 = vsel %vm218, %v339, 0.0
        %v345 = vsel %vm218, %v341, 0.0
        %346 = vst.msk [vmem:[#allocation3 + $0x60] sm:$0xff] %vm190, %v344
        %347 = vst.msk [vmem:[#allocation3 + $0x68] sm:$0xff] %vm190, %v345
        %v348 = vld [vmem:[#allocation2 + $0x8] sm:$0xff]
        %v349 = vld [vmem:[#allocation2 + $0x20] sm:$0xff]
        %352 = vrot.lane.b32.xlu0 %v348, 120
        %v353 = vpop.permute.xlu0 %352
        %354 = vrot.lane.b32.xlu0 %v349, 120
        %v355 = vpop.permute.xlu0 %354
        %358 = vst.msk [vmem:[#allocation3 + $0x70] sm:$0xff] %vm190, %v353
        %359 = vst.msk [vmem:[#allocation3 + $0x78] sm:$0xff] %vm190, %v355
        %v360 = vld [vmem:[#allocation2 + $0x8] sm:$0xff]
        %v361 = vld [vmem:[#allocation2 + $0x20] sm:$0xff]
        %364 = vrot.lane.b32.xlu0 %v360, 119
        %v365 = vpop.permute.xlu0 %364
        %366 = vrot.lane.b32.xlu0 %v361, 119
        %v367 = vpop.permute.xlu0 %366
        %v370 = vsel %vm269, %v365, 0.0
        %v371 = vsel %vm269, %v367, 0.0
        %372 = vst.msk [vmem:[#allocation3 + $0x80] sm:$0xff] %vm190, %v370
        %373 = vst.msk [vmem:[#allocation3 + $0x88] sm:$0xff] %vm190, %v371
        %v374 = vld [vmem:[#allocation4] sm:$0xff]
        %v375 = vld [vmem:[#allocation4 + $0x8] sm:$0xff]
        %v376 = vld [vmem:[#allocation4 + $0x10] sm:$0xff]
        %v377 = vld [vmem:[#allocation4 + $0x18] sm:$0xff]
        %v378 = vld [vmem:[#allocation4 + $0x20] sm:$0xff]
        %v379 = vld [vmem:[#allocation4 + $0x28] sm:$0xff]
        %v380 = vld [vmem:[#allocation4 + $0x30] sm:$0xff]
        %v381 = vld [vmem:[#allocation4 + $0x38] sm:$0xff]
        %v382 = vld [vmem:[#allocation3] sm:$0xff]
        %v383 = vld [vmem:[#allocation3 + $0x8] sm:$0xff]
        %v384 = vld [vmem:[#allocation3 + $0x10] sm:$0xff]
        %v385 = vld [vmem:[#allocation3 + $0x18] sm:$0xff]
        %v386 = vld [vmem:[#allocation3 + $0x20] sm:$0xff]
        %v387 = vld [vmem:[#allocation3 + $0x28] sm:$0xff]
        %v388 = vld [vmem:[#allocation3 + $0x30] sm:$0xff]
        %v389 = vld [vmem:[#allocation3 + $0x38] sm:$0xff]
        %v390 = vld [vmem:[#allocation3 + $0x40] sm:$0xff]
        %v391 = vld [vmem:[#allocation3 + $0x48] sm:$0xff]
        %v392 = vld [vmem:[#allocation3 + $0x50] sm:$0xff]
        %v393 = vld [vmem:[#allocation3 + $0x58] sm:$0xff]
        %v394 = vld [vmem:[#allocation3 + $0x60] sm:$0xff]
        %v395 = vld [vmem:[#allocation3 + $0x68] sm:$0xff]
        %v396 = vld [vmem:[#allocation3 + $0x70] sm:$0xff]
        %v397 = vld [vmem:[#allocation3 + $0x78] sm:$0xff]
        %v398 = vld [vmem:[#allocation3 + $0x80] sm:$0xff]
        %v399 = vld [vmem:[#allocation3 + $0x88] sm:$0xff]
        %v400 = vld [vmem:[%s2] sm:$0xff]
        %v401 = vld [vmem:[%s2 + $0x8] sm:$0xff]
        %v402 = vld [vmem:[%s2 + $0x10] sm:$0xff]
        %v403 = vld [vmem:[%s2 + $0x18] sm:$0xff]
        %405 = vset.pattern.permute.xlu0 0
        %406 = vperm.xlu0 %405, %v400
        %v407 = vpop.permute.xlu0 %406
        %410 = vset.pattern.permute.xlu0 0
        %411 = vperm.xlu0 %410, %v401
        %v412 = vpop.permute.xlu0 %411
        %415 = vset.pattern.permute.xlu0 0
        %416 = vperm.xlu0 %415, %v402
        %v417 = vpop.permute.xlu0 %416
        %420 = vset.pattern.permute.xlu0 0
        %421 = vperm.xlu0 %420, %v403
        %v422 = vpop.permute.xlu0 %421
        %vm424 = vcmask 130048
        %v426 = vsel %vm424, %v375, 0
        %v429 = vsel %vm424, %v377, 0
        %v432 = vsel %vm424, %v379, 0
        %v435 = vsel %vm424, %v381, 0
        %437 = vmatpush.msra.mxu0 %v397
        %438 = vmatpush.msra.mxu0 %v396
        %439 = vmatpush.msra.mxu0 %v395
        %440 = vmatpush.msra.mxu0 %v394
        %441 = vmatpush.msra.mxu0 %v393
        %442 = vmatpush.msra.mxu0 %v392
        %443 = vmatpush.msra.mxu0 %v391
        %444 = vmatpush.msra.mxu0 %v390
        %445 = vmatpush.msra.mxu0 %v389
        %446 = vmatpush.msra.mxu0 %v388
        %447 = vmatpush.msra.mxu0 %v387
        %448 = vmatpush.msra.mxu0 %v386
        %449 = vmatpush.msra.mxu0 %v385
        %450 = vmatpush.msra.mxu0 %v384
        %451 = vmatpush.msra.mxu0 %v383
        %452 = vmatpush.msra.mxu0 %v382
        %453 = vmatmul.f32.gmra.mxu0 %v374
        %v454 = vpop.f32.mrf.mxu0
        %v455 = vadd.f32 %v407, %v454
        %456 = vmatmul.f32.gmra.mxu0 %v376
        %v457 = vpop.f32.mrf.mxu0
        %v458 = vadd.f32 %v412, %v457
        %459 = vmatmul.f32.gmra.mxu0 %v378
        %v460 = vpop.f32.mrf.mxu0
        %v461 = vadd.f32 %v417, %v460
        %462 = vmatmul.f32.gmra.mxu0 %v380
        %v463 = vpop.f32.mrf.mxu0
        %v464 = vadd.f32 %v422, %v463
        %465 = vdwg.mxu0
        %466 = vmatpush.msra.mxu0 0.0
        %467 = vmatpush.msra.mxu0 0.0
        %468 = vmatpush.msra.mxu0 0.0
        %469 = vmatpush.msra.mxu0 0.0
        %470 = vmatpush.msra.mxu0 0.0
        %471 = vmatpush.msra.mxu0 0.0
        %472 = vmatpush.msra.mxu0 0.0
        %473 = vmatpush.msra.mxu0 0.0
        %474 = vmatpush.msra.mxu0 0.0
        %475 = vmatpush.msra.mxu0 0.0
        %476 = vmatpush.msra.mxu0 0.0
        %477 = vmatpush.msra.mxu0 0.0
        %478 = vmatpush.msra.mxu0 0.0
        %479 = vmatpush.msra.mxu0 0.0
        %480 = vmatpush.msra.mxu0 %v399
        %481 = vmatpush.msra.mxu0 %v398
        %482 = vmatmul.f32.gmra.mxu0 %v426
        %v483 = vpop.f32.mrf.mxu0
        %v484 = vadd.f32 %v455, %v483
        %485 = vmatmul.f32.gmra.mxu0 %v429
        %v486 = vpop.f32.mrf.mxu0
        %v487 = vadd.f32 %v458, %v486
        %488 = vmatmul.f32.gmra.mxu0 %v432
        %v489 = vpop.f32.mrf.mxu0
        %v490 = vadd.f32 %v461, %v489
        %491 = vmatmul.f32.gmra.mxu0 %v435
        %v492 = vpop.f32.mrf.mxu0
        %v493 = vadd.f32 %v464, %v492
        %494 = vdwg.mxu0
        %495 = vst.msk [vmem:[%s180] sm:$0xff] %vm190, %v484
        %496 = vst.msk [vmem:[%s180 + $0x8] sm:$0xff] %vm190, %v487
        %497 = vst.msk [vmem:[%s180 + $0x10] sm:$0xff] %vm190, %v490
        %498 = vst.msk [vmem:[%s180 + $0x18] sm:$0xff] %vm190, %v493
        %s499 = sand.u32 %s94, 1
        %s500 = scalar_lea.sflag [#allocation6], %s499
        %s501 = sand.u32 %s94, 1
        %s502 = smul.addr %s501, 32
        %s503 = scalar_lea.vmem [#allocation7], %s502
        // Predicated region
        $region37: #{tpu_custom_call.1} parent=31 // pred_check
          %p504 = pneg %p104
        $region38: #{tpu_custom_call.1} parent=31 // pred_check_branch
          %506 = sbr.rel (%p504) target = $region40
        $region39: #{tpu_custom_call.1} parent=31 // pred_region
          %508 = vsyncadd %s500, 0
          %s509 = smul.addr %s18, 4
          %s510 = smul.addr %s509, 8
          %s511 = scalar_lea.hbm %s3, %s510
          %s512 = sshll.u32 %s503, 4
          %s513 = int_to_ptr.vmem [resolvable:$true] %s512
          %s514 = sshll.u32 %s511, 4
          %s515 = int_to_ptr.hbm [resolvable:$true] %s514
          %520 = dma.vmem_to_hbm [thread:$0]  %s513, 512, %s515, %s500, 128, 128, 8
        $region40: #{tpu_custom_call.1} parent=31 // pred_fallthru
          _
      $region32: #{tpu_custom_call.1} parent=5 // pred_fallthru
        _
      %p521 = scmp.le.s32.totalorder 2, %s13
      // Predicated region
      $region41: #{tpu_custom_call.1} parent=5 // pred_check
        %p522 = pneg %p521
      $region42: #{tpu_custom_call.1} parent=5 // pred_check_branch
        %524 = sbr.rel (%p522) target = $region44
      $region43: #{tpu_custom_call.1} parent=5 // pred_region
        %s525 = ssub.s32 %s13, 2
        // Predicated region
        $region45: #{tpu_custom_call.1} parent=43 // pred_check
          %p526 = pneg %p110
        $region46: #{tpu_custom_call.1} parent=43 // pred_check_branch
          %528 = sbr.rel (%p526) target = $region48
        $region47: #{tpu_custom_call.1} parent=43 // pred_region
          %s529 = sand.u32 %s95, 1
          %s530 = scalar_lea.sflag [#allocation6], %s529
          %s531 = sand.u32 %s95, 1
          %s532 = smul.addr %s531, 32
          %s533 = scalar_lea.vmem [#allocation7], %s532
          %535 = dma.done %s530, 512
        $region48: #{tpu_custom_call.1} parent=43 // pred_fallthru
          _
      $region44: #{tpu_custom_call.1} parent=5 // pred_fallthru
        _
    $region6: #{tpu_custom_call.1} parent=1 // loop_footer
      %s17 = sadd.s32 1, %s13
    $region7: #{tpu_custom_call.1} parent=1 // loop_footer_branch
      %12 = sbr.rel target = $region3
    $region8: #{tpu_custom_call.1} parent=1 // loop_exit
      _
    %536 = vsyncpa [#allocation5], 1
    %s537 = scalar_lea.sflag [#allocation5], 1
    %538 = vsyncpa %s537, 1
    %539 = vsyncpa [#allocation6], 1
    %s540 = scalar_lea.sflag [#allocation6], 1
    %541 = vsyncpa %s540, 1

</llo_original>
